<compile_context>
chip_gen: v6e
topology: v6e:2x2x1
jax: 0.10.0
libtpu: 0.0.40
codegen_flags: <defaults>
</compile_context>

<pallas_src>
import numpy as np
import jax
import jax.numpy as jnp
from jax.experimental import pallas as pl
from jax.experimental.pallas import tpu as pltpu


# ------------------------------ fused kernels ----------------------------------
def _cfg_kernel(x_ref, wT_ref, beff_ref, out_ref):
    # x_ref:    (1, C, THW) VMEM latent tile, lane-dense
    # wT_ref:   (C, C)      SMEM transposed channel-mix weights (scalar reads)
    # beff_ref: (B, C)      SMEM per-batch CFG-folded bias
    b = pl.program_id(0)
    C = x_ref.shape[1]
    x = x_ref[0].astype(jnp.float32)                      # (C, THW)
    rows = []
    for d in range(C):                                    # unrolled VPU FMAs
        acc = x[0:1, :] * wT_ref[d, 0]
        for c in range(1, C):
            acc = acc + x[c:c + 1, :] * wT_ref[d, c]
        rows.append(acc + beff_ref[b, d])                 # CFG already folded in
    out_ref[0] = jnp.concatenate(rows, axis=0).astype(out_ref.dtype)


def _cfg_mask_kernel(x_ref, wT_ref, beff_ref, mask_ref, orig_ref, out_ref):
    # mask_ref: (1, MC, THW) with MC in {1, C}; broadcast across C in-kernel.
    b = pl.program_id(0)
    C = x_ref.shape[1]
    MC = mask_ref.shape[1]
    x = x_ref[0].astype(jnp.float32)
    m = mask_ref[0].astype(jnp.float32)                   # (MC, THW)
    o = orig_ref[0].astype(jnp.float32)                   # (C, THW)
    rows = []
    for d in range(C):
        acc = x[0:1, :] * wT_ref[d, 0]
        for c in range(1, C):
            acc = acc + x[c:c + 1, :] * wT_ref[d, c]
        den = acc + beff_ref[b, d]
        mr = m[0:1, :] if MC == 1 else m[d:d + 1, :]
        rows.append(o[d:d + 1, :] * (1.0 - mr) + mr * den)  # mask blend
    out_ref[0] = jnp.concatenate(rows, axis=0).astype(out_ref.dtype)


# --------------------------------- wrapper --------------------------------------
def _pick_hw_tile(hw, rows_per_lane_f32, batch, vmem_budget_bytes=24 << 20):
    """Largest multiple-of-128 divisor of hw such that the double-buffered f32
    streams fit the VMEM budget (v7x-safe) and the total grid has >=2 steps."""
    assert hw % 128 == 0
    cap = (vmem_budget_bytes // (2 * 4 * rows_per_lane_f32) // 128) * 128
    cap = max(128, min(hw, cap))
    if batch < 2 and hw >= 256:                 # guarantee >=2 steps for megacore
        cap = min(cap, (hw // 2 // 128) * 128)
    t = cap
    while hw % t != 0:
        t -= 128
    return t


def cfg_denoiser_forward(params, x, sigma, uncond, cond, cond_scale,
                         mask=None, orig_latent=None):
    """Mirrors CFGDenoiser.forward; x / mask / orig_latent are NCHW."""
    B, C, H, W = x.shape
    HW = H * W
    pad = (-HW) % 128                           # lane-dense padding (sliced off at end)
    HWp = HW + pad

    def _flat(a, ch):
        a = a.reshape(B, ch, HW)
        if pad:
            a = jnp.pad(a, ((0, 0), (0, 0), (0, pad)))
        return a

    x_f = _flat(x, C)

    # inner_model(x, sigma, c) = w^T x + c @ v + sigma * b_sig  (affine in cond)
    #   => uncond + (cond - uncond)*cs = w^T x + b_eff,
    #      b_eff = bias_u + cs * (bias_c - bias_u)          (folded CFG combine)
    sig_b = sigma.astype(jnp.float32)[:, None] * params["b_sig"].reshape(1, C)
    bias_u = uncond.astype(jnp.float32) @ params["v"] + sig_b          # (B, C)
    bias_c = cond.astype(jnp.float32) @ params["v"] + sig_b            # (B, C)
    cs = jnp.asarray(cond_scale, jnp.float32)
    b_eff = (bias_u + cs * (bias_c - bias_u)).astype(jnp.float32)      # (B, C)
    wT = jnp.asarray(params["w"], jnp.float32).T                       # (C, C)

    with_mask = mask is not None
    if with_mask:
        assert orig_latent is not None
        MC = mask.shape[1]                       # keep (B,1,H,W) un-broadcast
        mask_f = _flat(mask, MC)
        orig_f = _flat(orig_latent, C)
        rows_per_lane = 2 * C + C + MC           # x + out + orig + mask (f32)
    else:
        rows_per_lane = 2 * C                    # x + out

    thw = _pick_hw_tile(HWp, rows_per_lane, B)
    grid = (B, HWp // thw)

    x_spec = pl.BlockSpec((1, C, thw), lambda b, t: (b, 0, t))
    out_spec = pl.BlockSpec((1, C, thw), lambda b, t: (b, 0, t))
    smem = pl.BlockSpec(memory_space=pltpu.MemorySpace.SMEM)
    cparams = pltpu.CompilerParams(dimension_semantics=("parallel", "parallel"))
    out_shape = jax.ShapeDtypeStruct((B, C, HWp), x.dtype)

    if not with_mask:
        out = pl.pallas_call(
            _cfg_kernel,
            out_shape=out_shape, grid=grid,
            in_specs=[x_spec, smem, smem],
            out_specs=out_spec,
            compiler_params=cparams,
        )(x_f, wT, b_eff)
    else:
        m_spec = pl.BlockSpec((1, MC, thw), lambda b, t: (b, 0, t))
        out = pl.pallas_call(
            _cfg_mask_kernel,
            out_shape=out_shape, grid=grid,
            in_specs=[x_spec, smem, smem, m_spec, x_spec],
            out_specs=out_spec,
            compiler_params=cparams,
        )(x_f, wT, b_eff, mask_f, orig_f)

    if pad:
        out = out[:, :, :HW]
    return out.reshape(B, C, H, W)


# --------------------------------- reference ------------------------------------
def _ref_forward(params, x, sigma, uncond, cond, cond_scale, mask, orig_latent):
    """Pure-JAX transcription of CFGDenoiser.forward with the synthetic model."""
    B, C, H, W = x.shape
    xf = x.reshape(B, C, H * W)
    y = jnp.einsum("cd,bcn->bdn", params["w"], xf)
    bias_u = uncond @ params["v"] + sigma[:, None] * params["b_sig"].reshape(1, C)
    bias_c = cond @ params["v"] + sigma[:, None] * params["b_sig"].reshape(1, C)
    u = y + bias_u[:, :, None]
    c = y + bias_c[:, :, None]
    d = u + (c - u) * cond_scale
    if mask is not None:
        m = mask.reshape(B, mask.shape[1], H * W)
        o = orig_latent.reshape(B, C, H * W)
        d = o * (1.0 - m) + m * d
    return d.reshape(B, C, H, W)


# ----------------------------------- main ----------------------------------------
if __name__ == "__main__":
    B, C, H, W = 2, 4, 16, 16
    Dc = 8
    key = jax.random.PRNGKey(0)
    k = jax.random.split(key, 9)

    params = {
        "w": jax.random.normal(k[0], (C, C), jnp.float32) * 0.5,
        "v": jax.random.normal(k[1], (Dc, C), jnp.float32) * 0.1,
        "b_sig": jax.random.normal(k[2], (1, C), jnp.float32) * 0.05,
    }

    x = jax.random.normal(k[3], (B, C, H, W), jnp.float32)
    sigma = jax.random.uniform(k[4], (B,), jnp.float32, 0.1, 2.0)
    uncond = jax.random.normal(k[5], (B, Dc), jnp.float32)
    cond = jax.random.normal(k[6], (B, Dc), jnp.float32)
    mask1 = (jax.random.uniform(k[7], (B, 1, H, W), jnp.float32) > 0.5).astype(jnp.float32)
    maskC = (jax.random.uniform(k[8], (B, C, H, W), jnp.float32) > 0.5).astype(jnp.float32)
    orig_latent = jax.random.normal(jax.random.PRNGKey(1), (B, C, H, W), jnp.float32)
    cond_scale = 7.5

    # 1) single-channel (un-broadcast) mask branch
    out = cfg_denoiser_forward(params, x, sigma, uncond, cond, cond_scale,
                               mask=mask1, orig_latent=orig_latent)
    out = jax.block_until_ready(out)
    ref = _ref_forward(params, x, sigma, uncond, cond, cond_scale, mask1, orig_latent)
    np.testing.assert_allclose(np.asarray(out), np.asarray(ref), rtol=1e-5, atol=1e-5)

    # 2) full-channel mask branch
    out = cfg_denoiser_forward(params, x, sigma, uncond, cond, cond_scale,
                               mask=maskC, orig_latent=orig_latent)
    out = jax.block_until_ready(out)
    ref = _ref_forward(params, x, sigma, uncond, cond, cond_scale, maskC, orig_latent)
    np.testing.assert_allclose(np.asarray(out), np.asarray(ref), rtol=1e-5, atol=1e-5)

    # 3) mask=None branch
    out = cfg_denoiser_forward(params, x, sigma, uncond, cond, cond_scale)
    out = jax.block_until_ready(out)
    ref = _ref_forward(params, x, sigma, uncond, cond, cond_scale, None, None)
    np.testing.assert_allclose(np.asarray(out), np.asarray(ref), rtol=1e-5, atol=1e-5)

    print("KERNEL_OK")
</pallas_src>

<mosaic_0001>
module attributes {stable_mosaic.version = 11 : i64} {
  func.func @_cfg_mask_kernel(%arg0: i32, %arg1: i32, %arg2: memref<1x4x256xf32, #tpu.memory_space<vmem>>, %arg3: memref<4x4xf32, #tpu.memory_space<smem>>, %arg4: memref<2x4xf32, #tpu.memory_space<smem>>, %arg5: memref<1x1x256xf32, #tpu.memory_space<vmem>>, %arg6: memref<1x4x256xf32, #tpu.memory_space<vmem>>, %arg7: memref<1x4x256xf32, #tpu.memory_space<vmem>>) attributes {dimension_semantics = [#tpu.dimension_semantics<parallel>, #tpu.dimension_semantics<parallel>], iteration_bounds = array<i64: 2, 1>, scalar_prefetch = 0 : i64, scratch_operands = 0 : i64, tpu.core_type = #tpu.core_type<tc>, window_params = [{transform_indices = @transform_0, window_bounds = array<i64: 1, 4, 256>}, {transform_indices = @transform_1, window_bounds = array<i64: 4, 4>}, {transform_indices = @transform_2, window_bounds = array<i64: 2, 4>}, {transform_indices = @transform_3, window_bounds = array<i64: 1, 1, 256>}, {transform_indices = @transform_4, window_bounds = array<i64: 1, 4, 256>}, {transform_indices = @transform_5, window_bounds = array<i64: 1, 4, 256>}]} {
    %c0 = arith.constant 0 : index
    %c0_0 = arith.constant 0 : index
    %c0_1 = arith.constant 0 : index
    %0 = vector.load %arg2[%c0, %c0_0, %c0_1] : memref<1x4x256xf32, #tpu.memory_space<vmem>>, vector<1x4x256xf32>
    %1 = vector.shape_cast %0 : vector<1x4x256xf32> to vector<4x256xf32>
    %c0_2 = arith.constant 0 : index
    %c0_3 = arith.constant 0 : index
    %c0_4 = arith.constant 0 : index
    %2 = vector.load %arg5[%c0_2, %c0_3, %c0_4] : memref<1x1x256xf32, #tpu.memory_space<vmem>>, vector<1x1x256xf32>
    %3 = vector.shape_cast %2 : vector<1x1x256xf32> to vector<1x256xf32>
    %c0_5 = arith.constant 0 : index
    %c0_6 = arith.constant 0 : index
    %c0_7 = arith.constant 0 : index
    %4 = vector.load %arg6[%c0_5, %c0_6, %c0_7] : memref<1x4x256xf32, #tpu.memory_space<vmem>>, vector<1x4x256xf32>
    %5 = vector.shape_cast %4 : vector<1x4x256xf32> to vector<4x256xf32>
    %6 = vector.extract_strided_slice %1 {offsets = [0, 0], sizes = [1, 256], strides = [1, 1]} : vector<4x256xf32> to vector<1x256xf32>
    %c0_8 = arith.constant 0 : index
    %c0_9 = arith.constant 0 : index
    %7 = memref.load %arg3[%c0_8, %c0_9] : memref<4x4xf32, #tpu.memory_space<smem>>
    %8 = vector.broadcast %7 : f32 to vector<1x256xf32>
    %9 = arith.mulf %6, %8 : vector<1x256xf32>
    %10 = vector.extract_strided_slice %1 {offsets = [1, 0], sizes = [1, 256], strides = [1, 1]} : vector<4x256xf32> to vector<1x256xf32>
    %c0_10 = arith.constant 0 : index
    %c1 = arith.constant 1 : index
    %11 = memref.load %arg3[%c0_10, %c1] : memref<4x4xf32, #tpu.memory_space<smem>>
    %12 = vector.broadcast %11 : f32 to vector<1x256xf32>
    %13 = arith.mulf %10, %12 : vector<1x256xf32>
    %14 = arith.addf %9, %13 : vector<1x256xf32>
    %15 = vector.extract_strided_slice %1 {offsets = [2, 0], sizes = [1, 256], strides = [1, 1]} : vector<4x256xf32> to vector<1x256xf32>
    %c0_11 = arith.constant 0 : index
    %c2 = arith.constant 2 : index
    %16 = memref.load %arg3[%c0_11, %c2] : memref<4x4xf32, #tpu.memory_space<smem>>
    %17 = vector.broadcast %16 : f32 to vector<1x256xf32>
    %18 = arith.mulf %15, %17 : vector<1x256xf32>
    %19 = arith.addf %14, %18 : vector<1x256xf32>
    %20 = vector.extract_strided_slice %1 {offsets = [3, 0], sizes = [1, 256], strides = [1, 1]} : vector<4x256xf32> to vector<1x256xf32>
    %c0_12 = arith.constant 0 : index
    %c3 = arith.constant 3 : index
    %21 = memref.load %arg3[%c0_12, %c3] : memref<4x4xf32, #tpu.memory_space<smem>>
    %22 = vector.broadcast %21 : f32 to vector<1x256xf32>
    %23 = arith.mulf %20, %22 : vector<1x256xf32>
    %24 = arith.addf %19, %23 : vector<1x256xf32>
    %25 = arith.index_cast %arg0 : i32 to index
    %c0_13 = arith.constant 0 : index
    %26 = memref.load %arg4[%25, %c0_13] : memref<2x4xf32, #tpu.memory_space<smem>>
    %27 = vector.broadcast %26 : f32 to vector<1x256xf32>
    %28 = arith.addf %24, %27 : vector<1x256xf32>
    %29 = vector.extract_strided_slice %5 {offsets = [0, 0], sizes = [1, 256], strides = [1, 1]} : vector<4x256xf32> to vector<1x256xf32>
    %cst = arith.constant 1.000000e+00 : f32
    %30 = vector.broadcast %cst : f32 to vector<1x256xf32>
    %31 = arith.subf %30, %3 : vector<1x256xf32>
    %32 = arith.mulf %29, %31 : vector<1x256xf32>
    %33 = arith.mulf %3, %28 : vector<1x256xf32>
    %34 = arith.addf %32, %33 : vector<1x256xf32>
    %35 = vector.extract_strided_slice %1 {offsets = [0, 0], sizes = [1, 256], strides = [1, 1]} : vector<4x256xf32> to vector<1x256xf32>
    %c1_14 = arith.constant 1 : index
    %c0_15 = arith.constant 0 : index
    %36 = memref.load %arg3[%c1_14, %c0_15] : memref<4x4xf32, #tpu.memory_space<smem>>
    %37 = vector.broadcast %36 : f32 to vector<1x256xf32>
    %38 = arith.mulf %35, %37 : vector<1x256xf32>
    %39 = vector.extract_strided_slice %1 {offsets = [1, 0], sizes = [1, 256], strides = [1, 1]} : vector<4x256xf32> to vector<1x256xf32>
    %c1_16 = arith.constant 1 : index
    %c1_17 = arith.constant 1 : index
    %40 = memref.load %arg3[%c1_16, %c1_17] : memref<4x4xf32, #tpu.memory_space<smem>>
    %41 = vector.broadcast %40 : f32 to vector<1x256xf32>
    %42 = arith.mulf %39, %41 : vector<1x256xf32>
    %43 = arith.addf %38, %42 : vector<1x256xf32>
    %44 = vector.extract_strided_slice %1 {offsets = [2, 0], sizes = [1, 256], strides = [1, 1]} : vector<4x256xf32> to vector<1x256xf32>
    %c1_18 = arith.constant 1 : index
    %c2_19 = arith.constant 2 : index
    %45 = memref.load %arg3[%c1_18, %c2_19] : memref<4x4xf32, #tpu.memory_space<smem>>
    %46 = vector.broadcast %45 : f32 to vector<1x256xf32>
    %47 = arith.mulf %44, %46 : vector<1x256xf32>
    %48 = arith.addf %43, %47 : vector<1x256xf32>
    %49 = vector.extract_strided_slice %1 {offsets = [3, 0], sizes = [1, 256], strides = [1, 1]} : vector<4x256xf32> to vector<1x256xf32>
    %c1_20 = arith.constant 1 : index
    %c3_21 = arith.constant 3 : index
    %50 = memref.load %arg3[%c1_20, %c3_21] : memref<4x4xf32, #tpu.memory_space<smem>>
    %51 = vector.broadcast %50 : f32 to vector<1x256xf32>
    %52 = arith.mulf %49, %51 : vector<1x256xf32>
    %53 = arith.addf %48, %52 : vector<1x256xf32>
    %54 = arith.index_cast %arg0 : i32 to index
    %c1_22 = arith.constant 1 : index
    %55 = memref.load %arg4[%54, %c1_22] : memref<2x4xf32, #tpu.memory_space<smem>>
    %56 = vector.broadcast %55 : f32 to vector<1x256xf32>
    %57 = arith.addf %53, %56 : vector<1x256xf32>
    %58 = vector.extract_strided_slice %5 {offsets = [1, 0], sizes = [1, 256], strides = [1, 1]} : vector<4x256xf32> to vector<1x256xf32>
    %cst_23 = arith.constant 1.000000e+00 : f32
    %59 = vector.broadcast %cst_23 : f32 to vector<1x256xf32>
    %60 = arith.subf %59, %3 : vector<1x256xf32>
    %61 = arith.mulf %58, %60 : vector<1x256xf32>
    %62 = arith.mulf %3, %57 : vector<1x256xf32>
    %63 = arith.addf %61, %62 : vector<1x256xf32>
    %64 = vector.extract_strided_slice %1 {offsets = [0, 0], sizes = [1, 256], strides = [1, 1]} : vector<4x256xf32> to vector<1x256xf32>
    %c2_24 = arith.constant 2 : index
    %c0_25 = arith.constant 0 : index
    %65 = memref.load %arg3[%c2_24, %c0_25] : memref<4x4xf32, #tpu.memory_space<smem>>
    %66 = vector.broadcast %65 : f32 to vector<1x256xf32>
    %67 = arith.mulf %64, %66 : vector<1x256xf32>
    %68 = vector.extract_strided_slice %1 {offsets = [1, 0], sizes = [1, 256], strides = [1, 1]} : vector<4x256xf32> to vector<1x256xf32>
    %c2_26 = arith.constant 2 : index
    %c1_27 = arith.constant 1 : index
    %69 = memref.load %arg3[%c2_26, %c1_27] : memref<4x4xf32, #tpu.memory_space<smem>>
    %70 = vector.broadcast %69 : f32 to vector<1x256xf32>
    %71 = arith.mulf %68, %70 : vector<1x256xf32>
    %72 = arith.addf %67, %71 : vector<1x256xf32>
    %73 = vector.extract_strided_slice %1 {offsets = [2, 0], sizes = [1, 256], strides = [1, 1]} : vector<4x256xf32> to vector<1x256xf32>
    %c2_28 = arith.constant 2 : index
    %c2_29 = arith.constant 2 : index
    %74 = memref.load %arg3[%c2_28, %c2_29] : memref<4x4xf32, #tpu.memory_space<smem>>
    %75 = vector.broadcast %74 : f32 to vector<1x256xf32>
    %76 = arith.mulf %73, %75 : vector<1x256xf32>
    %77 = arith.addf %72, %76 : vector<1x256xf32>
    %78 = vector.extract_strided_slice %1 {offsets = [3, 0], sizes = [1, 256], strides = [1, 1]} : vector<4x256xf32> to vector<1x256xf32>
    %c2_30 = arith.constant 2 : index
    %c3_31 = arith.constant 3 : index
    %79 = memref.load %arg3[%c2_30, %c3_31] : memref<4x4xf32, #tpu.memory_space<smem>>
    %80 = vector.broadcast %79 : f32 to vector<1x256xf32>
    %81 = arith.mulf %78, %80 : vector<1x256xf32>
    %82 = arith.addf %77, %81 : vector<1x256xf32>
    %83 = arith.index_cast %arg0 : i32 to index
    %c2_32 = arith.constant 2 : index
    %84 = memref.load %arg4[%83, %c2_32] : memref<2x4xf32, #tpu.memory_space<smem>>
    %85 = vector.broadcast %84 : f32 to vector<1x256xf32>
    %86 = arith.addf %82, %85 : vector<1x256xf32>
    %87 = vector.extract_strided_slice %5 {offsets = [2, 0], sizes = [1, 256], strides = [1, 1]} : vector<4x256xf32> to vector<1x256xf32>
    %cst_33 = arith.constant 1.000000e+00 : f32
    %88 = vector.broadcast %cst_33 : f32 to vector<1x256xf32>
    %89 = arith.subf %88, %3 : vector<1x256xf32>
    %90 = arith.mulf %87, %89 : vector<1x256xf32>
    %91 = arith.mulf %3, %86 : vector<1x256xf32>
    %92 = arith.addf %90, %91 : vector<1x256xf32>
    %93 = vector.extract_strided_slice %1 {offsets = [0, 0], sizes = [1, 256], strides = [1, 1]} : vector<4x256xf32> to vector<1x256xf32>
    %c3_34 = arith.constant 3 : index
    %c0_35 = arith.constant 0 : index
    %94 = memref.load %arg3[%c3_34, %c0_35] : memref<4x4xf32, #tpu.memory_space<smem>>
    %95 = vector.broadcast %94 : f32 to vector<1x256xf32>
    %96 = arith.mulf %93, %95 : vector<1x256xf32>
    %97 = vector.extract_strided_slice %1 {offsets = [1, 0], sizes = [1, 256], strides = [1, 1]} : vector<4x256xf32> to vector<1x256xf32>
    %c3_36 = arith.constant 3 : index
    %c1_37 = arith.constant 1 : index
    %98 = memref.load %arg3[%c3_36, %c1_37] : memref<4x4xf32, #tpu.memory_space<smem>>
    %99 = vector.broadcast %98 : f32 to vector<1x256xf32>
    %100 = arith.mulf %97, %99 : vector<1x256xf32>
    %101 = arith.addf %96, %100 : vector<1x256xf32>
    %102 = vector.extract_strided_slice %1 {offsets = [2, 0], sizes = [1, 256], strides = [1, 1]} : vector<4x256xf32> to vector<1x256xf32>
    %c3_38 = arith.constant 3 : index
    %c2_39 = arith.constant 2 : index
    %103 = memref.load %arg3[%c3_38, %c2_39] : memref<4x4xf32, #tpu.memory_space<smem>>
    %104 = vector.broadcast %103 : f32 to vector<1x256xf32>
    %105 = arith.mulf %102, %104 : vector<1x256xf32>
    %106 = arith.addf %101, %105 : vector<1x256xf32>
    %107 = vector.extract_strided_slice %1 {offsets = [3, 0], sizes = [1, 256], strides = [1, 1]} : vector<4x256xf32> to vector<1x256xf32>
    %c3_40 = arith.constant 3 : index
    %c3_41 = arith.constant 3 : index
    %108 = memref.load %arg3[%c3_40, %c3_41] : memref<4x4xf32, #tpu.memory_space<smem>>
    %109 = vector.broadcast %108 : f32 to vector<1x256xf32>
    %110 = arith.mulf %107, %109 : vector<1x256xf32>
    %111 = arith.addf %106, %110 : vector<1x256xf32>
    %112 = arith.index_cast %arg0 : i32 to index
    %c3_42 = arith.constant 3 : index
    %113 = memref.load %arg4[%112, %c3_42] : memref<2x4xf32, #tpu.memory_space<smem>>
    %114 = vector.broadcast %113 : f32 to vector<1x256xf32>
    %115 = arith.addf %111, %114 : vector<1x256xf32>
    %116 = vector.extract_strided_slice %5 {offsets = [3, 0], sizes = [1, 256], strides = [1, 1]} : vector<4x256xf32> to vector<1x256xf32>
    %cst_43 = arith.constant 1.000000e+00 : f32
    %117 = vector.broadcast %cst_43 : f32 to vector<1x256xf32>
    %118 = arith.subf %117, %3 : vector<1x256xf32>
    %119 = arith.mulf %116, %118 : vector<1x256xf32>
    %120 = arith.mulf %3, %115 : vector<1x256xf32>
    %121 = arith.addf %119, %120 : vector<1x256xf32>
    %122 = tpu.concatenate %34, %63, %92, %121 in 0 : vector<1x256xf32>, vector<1x256xf32>, vector<1x256xf32>, vector<1x256xf32> -> vector<4x256xf32>
    %c0_44 = arith.constant 0 : index
    %c0_45 = arith.constant 0 : index
    %c0_46 = arith.constant 0 : index
    %123 = vector.load %arg7[%c0_44, %c0_45, %c0_46] : memref<1x4x256xf32, #tpu.memory_space<vmem>>, vector<1x4x256xf32>
    %124 = vector.shape_cast %123 : vector<1x4x256xf32> to vector<4x256xf32>
    %125 = vector.shape_cast %122 : vector<4x256xf32> to vector<1x4x256xf32>
    tpu.vector_store %arg7[%c0_44, %c0_45, %c0_46], %125 {strides = array<i32>} : memref<1x4x256xf32, #tpu.memory_space<vmem>>, vector<1x4x256xf32>,
    return
  }
  func.func @transform_0(%arg0: i32, %arg1: i32) -> (i32, i32, i32) {
    %c0_i32 = arith.constant 0 : i32
    %c0_i32_0 = arith.constant 0 : i32
    return %arg0, %c0_i32, %arg1 : i32, i32, i32
  }
  func.func @transform_1(%arg0: i32, %arg1: i32) -> (i32, i32) {
    %c0_i32 = arith.constant 0 : i32
    %c0_i32_0 = arith.constant 0 : i32
    %c0_i32_1 = arith.constant 0 : i32
    return %c0_i32, %c0_i32_0 : i32, i32
  }
  func.func @transform_2(%arg0: i32, %arg1: i32) -> (i32, i32) {
    %c0_i32 = arith.constant 0 : i32
    %c0_i32_0 = arith.constant 0 : i32
    %c0_i32_1 = arith.constant 0 : i32
    return %c0_i32, %c0_i32_0 : i32, i32
  }
  func.func @transform_3(%arg0: i32, %arg1: i32) -> (i32, i32, i32) {
    %c0_i32 = arith.constant 0 : i32
    %c0_i32_0 = arith.constant 0 : i32
    return %arg0, %c0_i32, %arg1 : i32, i32, i32
  }
  func.func @transform_4(%arg0: i32, %arg1: i32) -> (i32, i32, i32) {
    %c0_i32 = arith.constant 0 : i32
    %c0_i32_0 = arith.constant 0 : i32
    return %arg0, %c0_i32, %arg1 : i32, i32, i32
  }
  func.func @transform_5(%arg0: i32, %arg1: i32) -> (i32, i32, i32) {
    %c0_i32 = arith.constant 0 : i32
    %c0_i32_0 = arith.constant 0 : i32
    return %arg0, %c0_i32, %arg1 : i32, i32, i32
  }
}

</mosaic_0001>

<llo_original>
// kernel: tpu_custom_call.1
$region0: #{tpu_custom_call.1}
  #allocation0 [shape = 'u32[]', space=smem, size = 0x4, offset = 0x4, fixed_abs, tag = 'smem constant byte address 0x4 - core index']
  #allocation1 [shape = 'u32[144,128]{1,0:T(1,128)}', space=vmem, size = 0x12000, scoped, tag = 'internal scratch']
  %s0 = inlined_call_operand.hbm [shape: f32[2,4,256], index: 0, kind: input, shape index: {}]
  %s1 = inlined_call_operand.hbm [shape: f32[4,4], index: 1, kind: input, shape index: {}]
  %s2 = inlined_call_operand.hbm [shape: f32[2,4], index: 2, kind: input, shape index: {}]
  %s3 = inlined_call_operand.vmem [shape: f32[2,1,256], index: 3, kind: input, shape index: {}]
  %s4 = inlined_call_operand.hbm [shape: f32[2,4,256], index: 4, kind: input, shape index: {}]
  %s5 = inlined_call_operand.hbm [shape: f32[2,4,256], index: 5, kind: output, shape index: {}]
  %s6 = sld [smem:[#allocation0]]
  $region69: #{tpu_custom_call.1} parent=0
    _
  %s8 = ssub.s32 1, %s6
  %s9 = scalar_select 0, %s8, %s6
  $region1: #{tpu_custom_call.1} parent=0
    #allocation2 [shape = 'u8[8192]{0}', space=vmem, size = 0x2000, scoped, tag = 'input window, operand 0']
    #allocation3 [shape = 's32[2]{0}', space=sflag, size = 0x8, scoped, tag = 'scoped memory for tpu_custom_call.1']
    #allocation4 [shape = 's32[2]{0}', space=sflag, size = 0x8, scoped, tag = 'scoped memory for tpu_custom_call.1']
    #allocation5 [shape = 's32[2]{0}', space=sflag, size = 0x8, scoped, tag = 'scoped memory for tpu_custom_call.1']
    #allocation6 [shape = 'u8[2048]{0}', space=smem, size = 0x800, scoped, tag = 'input window, operand 1, single buffered']
    #allocation7 [shape = 'u8[1024]{0}', space=smem, size = 0x400, scoped, tag = 'input window, operand 2, single buffered']
    #allocation8 [shape = 's32[1]{0}', space=sflag, size = 0x4, scoped, tag = 'scoped memory for tpu_custom_call.1']
    #allocation9 [shape = 'u8[8192]{0}', space=vmem, size = 0x2000, scoped, tag = 'input window, operand 4']
    #allocation10 [shape = 's32[2]{0}', space=sflag, size = 0x8, scoped, tag = 'scoped memory for tpu_custom_call.1']
    #allocation11 [shape = 'u8[8192]{0}', space=vmem, size = 0x2000, scoped, tag = 'output window, operand 0']
    %10 = vsyncpa [#allocation3], 0
    %s11 = scalar_lea.sflag [#allocation3], 1
    %12 = vsyncpa %s11, 0
    %13 = vsyncpa [#allocation5], 0
    %14 = vsyncpa [#allocation8], 0
    %15 = vsyncpa [#allocation10], 0
    %s16 = scalar_lea.sflag [#allocation10], 1
    %17 = vsyncpa %s16, 0
    %18 = vsyncpa [#allocation4], 0
    %s19 = scalar_lea.sflag [#allocation4], 1
    %20 = vsyncpa %s19, 0
    loop: start=0, step=1, limit=4
    $region2: #{tpu_custom_call.1} parent=1 // loop_pre_header
      _
    $region3: #{tpu_custom_call.1} parent=1 // loop_header
      %s22 = sphi 0, %s26
      %p23 = scmp.ge.s32.totalorder %s22, 4
      %s29 = sphi 0, %s41
      %s30 = sphi 0, %s37
      %s31 = sphi 0, %s29
      %s32 = sphi 0, %s30
      %s33 = sphi 0, %s31
      %s34 = sphi 0, %s32
      %s46 = sphi 0, %s48
      %s49 = sphi 0, %s46
      %s50 = sphi 0, %s49
      %s66 = sphi 0, %s50
      %s70 = sphi 0, %s70
      %s72 = sphi 0, %s70
      %s73 = sphi 0, %s72
      %s87 = sphi 0, %s73
      %s91 = sphi 0, %s91
      %s93 = sphi 0, %s91
      %s94 = sphi 0, %s93
      %s108 = sphi 0, %s94
      %s116 = sphi 0, %s118
      %s119 = sphi 0, %s116
      %s120 = sphi 0, %s119
      %s136 = sphi 0, %s120
      %s144 = sphi 0, %s146
      %s147 = sphi 0, %s144
      %s148 = sphi 0, %s147
      %s164 = sphi 0, %s148
      %s172 = sphi 0, %s174
      %s175 = sphi 0, %s172
      %s176 = sphi 0, %s175
      %s192 = sphi 0, %s176
    $region4: #{tpu_custom_call.1} parent=1 // loop_header_branch
      %25 = sbr.rel (%p23) target = $region8
    $region5: #{tpu_custom_call.1} parent=1 // loop_body
      %s27 = ssub.s32 %s22, 1
      %s28 = ssub.s32 %s22, 2
      %s35 = sadd.s32 1, %s30
      %p36 = scmp.ge.s32.totalorder %s35, 1
      %s37 = scalar_select %p36, 0, %s35
      %s38 = sadd.s32 1, %s29
      %s39 = scalar_select %p36, %s38, %s29
      %p40 = scmp.ge.s32.totalorder %s39, 2
      %s41 = scalar_select %p40, 0, %s39
      %s42 = ssub.s32 %s29, %s41
      %s43 = ssub.s32 %s30, %s37
      %s44 = sor.u32 %s42, %s43
      %p45 = scmp.eq.s32.totalorder %s44, 0
      %s47 = sadd.s32 %s46, 1
      %s48 = scalar_select %p45, %s46, %s47
      %p51 = pneg %p45
      %p52 = scmp.eq.s32.totalorder %s22, 1
      %p53 = por %p51, %p52
      %p54 = scmp.ne.s32.totalorder %s46, %s49
      %p55 = scmp.eq.s32.totalorder %s22, 0
      %p56 = por %p54, %p55
      %p57 = scmp.ne.s32.totalorder %s46, %s49
      %p58 = scmp.eq.s32.totalorder %s27, 1
      %p59 = por %p57, %p58
      %p60 = scmp.ne.s32.totalorder %s49, %s50
      %p61 = scmp.eq.s32.totalorder %s27, 0
      %p62 = por %p60, %p61
      %p63 = scmp.ne.s32.totalorder %s49, %s50
      %p64 = scmp.eq.s32.totalorder %s28, 1
      %p65 = por %p63, %p64
      %p67 = scmp.ne.s32.totalorder %s50, %s66
      %p68 = scmp.eq.s32.totalorder %s28, 0
      %p69 = por %p67, %p68
      %s71 = sadd.s32 %s70, 1
      %p74 = scmp.eq.s32.totalorder %s22, 1
      %p75 = scmp.ne.s32.totalorder %s70, %s72
      %p76 = scmp.eq.s32.totalorder %s22, 0
      %p77 = por %p75, %p76
      %p78 = scmp.ne.s32.totalorder %s70, %s72
      %p79 = scmp.eq.s32.totalorder %s27, 1
      %p80 = por %p78, %p79
      %p81 = scmp.ne.s32.totalorder %s72, %s73
      %p82 = scmp.eq.s32.totalorder %s27, 0
      %p83 = por %p81, %p82
      %p84 = scmp.ne.s32.totalorder %s72, %s73
      %p85 = scmp.eq.s32.totalorder %s28, 1
      %p86 = por %p84, %p85
      %p88 = scmp.ne.s32.totalorder %s73, %s87
      %p89 = scmp.eq.s32.totalorder %s28, 0
      %p90 = por %p88, %p89
      %s92 = sadd.s32 %s91, 1
      %p95 = scmp.eq.s32.totalorder %s22, 1
      %p96 = scmp.ne.s32.totalorder %s91, %s93
      %p97 = scmp.eq.s32.totalorder %s22, 0
      %p98 = por %p96, %p97
      %p99 = scmp.ne.s32.totalorder %s91, %s93
      %p100 = scmp.eq.s32.totalorder %s27, 1
      %p101 = por %p99, %p100
      %p102 = scmp.ne.s32.totalorder %s93, %s94
      %p103 = scmp.eq.s32.totalorder %s27, 0
      %p104 = por %p102, %p103
      %p105 = scmp.ne.s32.totalorder %s93, %s94
      %p106 = scmp.eq.s32.totalorder %s28, 1
      %p107 = por %p105, %p106
      %p109 = scmp.ne.s32.totalorder %s94, %s108
      %p110 = scmp.eq.s32.totalorder %s28, 0
      %p111 = por %p109, %p110
      %s112 = ssub.s32 %s29, %s41
      %s113 = ssub.s32 %s30, %s37
      %s114 = sor.u32 %s112, %s113
      %p115 = scmp.eq.s32.totalorder %s114, 0
      %s117 = sadd.s32 %s116, 1
      %s118 = scalar_select %p115, %s116, %s117
      %p121 = pneg %p115
      %p122 = scmp.eq.s32.totalorder %s22, 1
      %p123 = por %p121, %p122
      %p124 = scmp.ne.s32.totalorder %s116, %s119
      %p125 = scmp.eq.s32.totalorder %s22, 0
      %p126 = por %p124, %p125
      %p127 = scmp.ne.s32.totalorder %s116, %s119
      %p128 = scmp.eq.s32.totalorder %s27, 1
      %p129 = por %p127, %p128
      %p130 = scmp.ne.s32.totalorder %s119, %s120
      %p131 = scmp.eq.s32.totalorder %s27, 0
      %p132 = por %p130, %p131
      %p133 = scmp.ne.s32.totalorder %s119, %s120
      %p134 = scmp.eq.s32.totalorder %s28, 1
      %p135 = por %p133, %p134
      %p137 = scmp.ne.s32.totalorder %s120, %s136
      %p138 = scmp.eq.s32.totalorder %s28, 0
      %p139 = por %p137, %p138
      %s140 = ssub.s32 %s29, %s41
      %s141 = ssub.s32 %s30, %s37
      %s142 = sor.u32 %s140, %s141
      %p143 = scmp.eq.s32.totalorder %s142, 0
      %s145 = sadd.s32 %s144, 1
      %s146 = scalar_select %p143, %s144, %s145
      %p149 = pneg %p143
      %p150 = scmp.eq.s32.totalorder %s22, 1
      %p151 = por %p149, %p150
      %p152 = scmp.ne.s32.totalorder %s144, %s147
      %p153 = scmp.eq.s32.totalorder %s22, 0
      %p154 = por %p152, %p153
      %p155 = scmp.ne.s32.totalorder %s144, %s147
      %p156 = scmp.eq.s32.totalorder %s27, 1
      %p157 = por %p155, %p156
      %p158 = scmp.ne.s32.totalorder %s147, %s148
      %p159 = scmp.eq.s32.totalorder %s27, 0
      %p160 = por %p158, %p159
      %p161 = scmp.ne.s32.totalorder %s147, %s148
      %p162 = scmp.eq.s32.totalorder %s28, 1
      %p163 = por %p161, %p162
      %p165 = scmp.ne.s32.totalorder %s148, %s164
      %p166 = scmp.eq.s32.totalorder %s28, 0
      %p167 = por %p165, %p166
      %s168 = ssub.s32 %s29, %s41
      %s169 = ssub.s32 %s30, %s37
      %s170 = sor.u32 %s168, %s169
      %p171 = scmp.eq.s32.totalorder %s170, 0
      %s173 = sadd.s32 %s172, 1
      %s174 = scalar_select %p171, %s172, %s173
      %p177 = pneg %p171
      %p178 = scmp.eq.s32.totalorder %s22, 1
      %p179 = por %p177, %p178
      %p180 = scmp.ne.s32.totalorder %s172, %s175
      %p181 = scmp.eq.s32.totalorder %s22, 0
      %p182 = por %p180, %p181
      %p183 = scmp.ne.s32.totalorder %s172, %s175
      %p184 = scmp.eq.s32.totalorder %s27, 1
      %p185 = por %p183, %p184
      %p186 = scmp.ne.s32.totalorder %s175, %s176
      %p187 = scmp.eq.s32.totalorder %s27, 0
      %p188 = por %p186, %p187
      %p189 = scmp.ne.s32.totalorder %s175, %s176
      %p190 = scmp.eq.s32.totalorder %s28, 1
      %p191 = por %p189, %p190
      %p193 = scmp.ne.s32.totalorder %s176, %s192
      %p194 = scmp.eq.s32.totalorder %s28, 0
      %p195 = por %p193, %p194
      %p196 = scmp.le.s32.totalorder 1, %s22
      %p197 = scmp.lt.s32.totalorder %s22, 3
      %p198 = pnand %p196, %p197
      %p199 = pneg %p198
      // Predicated region
      $region9: #{tpu_custom_call.1} parent=5 // pred_check
        _
      $region10: #{tpu_custom_call.1} parent=5 // pred_check_branch
        %201 = sbr.rel (%p198) target = $region12
      $region11: #{tpu_custom_call.1} parent=5 // pred_region
        %s202 = ssub.s32 %s22, 1
        // Predicated region
        $region13: #{tpu_custom_call.1} parent=11 // pred_check
          %p203 = pneg %p83
        $region14: #{tpu_custom_call.1} parent=11 // pred_check_branch
          %205 = sbr.rel (%p203) target = $region16
        $region15: #{tpu_custom_call.1} parent=11 // pred_region
          %s207 = ssub.s32 64, 64
          %208 = vsyncadd [#allocation5], %s207
          %211 = dma.hbm_to_smem %s1, 64, [#allocation6], [#allocation5]
        $region16: #{tpu_custom_call.1} parent=11 // pred_fallthru
          _
        // Predicated region
        $region17: #{tpu_custom_call.1} parent=11 // pred_check
          %p212 = pneg %p104
        $region18: #{tpu_custom_call.1} parent=11 // pred_check_branch
          %214 = sbr.rel (%p212) target = $region20
        $region19: #{tpu_custom_call.1} parent=11 // pred_region
          %s216 = ssub.s32 32, 32
          %217 = vsyncadd [#allocation8], %s216
          %220 = dma.hbm_to_smem %s2, 32, [#allocation7], [#allocation8]
        $region20: #{tpu_custom_call.1} parent=11 // pred_fallthru
          _
      $region12: #{tpu_custom_call.1} parent=5 // pred_fallthru
        _
      %p221 = scmp.lt.s32.totalorder %s22, 2
      // Predicated region
      $region21: #{tpu_custom_call.1} parent=5 // pred_check
        %p222 = pneg %p221
      $region22: #{tpu_custom_call.1} parent=5 // pred_check_branch
        %224 = sbr.rel (%p222) target = $region24
      $region23: #{tpu_custom_call.1} parent=5 // pred_region
        // Predicated region
        $region25: #{tpu_custom_call.1} parent=23 // pred_check
          %p225 = pneg %p56
        $region26: #{tpu_custom_call.1} parent=23 // pred_check_branch
          %227 = sbr.rel (%p225) target = $region28
        $region27: #{tpu_custom_call.1} parent=23 // pred_region
          %s228 = sand.u32 %s46, 1
          %s229 = scalar_lea.sflag [#allocation3], %s228
          %s230 = sand.u32 %s46, 1
          %s231 = smul.addr %s230, 8
          %s232 = scalar_lea.vmem [#allocation2], %s231
          %s233 = smul.u32 2, %s30
          %s235 = ssub.s32 128, 128
          %236 = vsyncadd %s229, %s235
          %s237 = smul.addr %s29, 2
          %s238 = sadd.s32 %s233, %s237
          %s239 = smul.addr %s238, 64
          %s240 = scalar_lea.hbm %s0, %s239
          %s242 = sshll.u32 %s232, 4
          %s243 = int_to_ptr.vmem [resolvable:$true] %s242
          %245 = dma.hbm_to_vmem [thread:$0]  %s240, 128, %s243, %s229
        $region28: #{tpu_custom_call.1} parent=23 // pred_fallthru
          _
        // Predicated region
        $region29: #{tpu_custom_call.1} parent=23 // pred_check
          %p246 = pneg %p126
        $region30: #{tpu_custom_call.1} parent=23 // pred_check_branch
          %248 = sbr.rel (%p246) target = $region32
        $region31: #{tpu_custom_call.1} parent=23 // pred_region
          %s249 = smul.u32 2, %s30
          %p250 = scmp.lt.s32.totalorder %s29, 1
          %s251 = scalar_select %p250, %s29, 1
          %p252 = scmp.lt.s32.totalorder %s249, 1
          %s253 = scalar_select %p252, %s249, 1
          %s254 = smul.addr %s251, 2
          %s255 = sadd.s32 %s253, %s254
          %s256 = scalar_lea.vmem %s3, %s255
          %s257 = smul.u32 2, %s30
        $region32: #{tpu_custom_call.1} parent=23 // pred_fallthru
          _
        // Predicated region
        $region33: #{tpu_custom_call.1} parent=23 // pred_check
          %p258 = pneg %p154
        $region34: #{tpu_custom_call.1} parent=23 // pred_check_branch
          %260 = sbr.rel (%p258) target = $region36
        $region35: #{tpu_custom_call.1} parent=23 // pred_region
          %s261 = sand.u32 %s144, 1
          %s262 = scalar_lea.sflag [#allocation10], %s261
          %s263 = sand.u32 %s144, 1
          %s264 = smul.addr %s263, 8
          %s265 = scalar_lea.vmem [#allocation9], %s264
          %s266 = smul.u32 2, %s30
          %s268 = ssub.s32 128, 128
          %269 = vsyncadd %s262, %s268
          %s270 = smul.addr %s29, 2
          %s271 = sadd.s32 %s266, %s270
          %s272 = smul.addr %s271, 64
          %s273 = scalar_lea.hbm %s4, %s272
          %s275 = sshll.u32 %s265, 4
          %s276 = int_to_ptr.vmem [resolvable:$true] %s275
          %278 = dma.hbm_to_vmem [thread:$0]  %s273, 128, %s276, %s262
        $region36: #{tpu_custom_call.1} parent=23 // pred_fallthru
          _
      $region24: #{tpu_custom_call.1} parent=5 // pred_fallthru
        _
      %p279 = scmp.le.s32.totalorder 1, %s22
      %p280 = scmp.lt.s32.totalorder %s22, 3
      %p281 = pnand %p279, %p280
      %p282 = pneg %p281
      // Predicated region
      $region37: #{tpu_custom_call.1} parent=5 // pred_check
        _
      $region38: #{tpu_custom_call.1} parent=5 // pred_check_branch
        %284 = sbr.rel (%p281) target = $region40
      $region39: #{tpu_custom_call.1} parent=5 // pred_region
        %s285 = ssub.s32 %s22, 1
        %s286 = sand.u32 %s49, 1
        %s287 = scalar_lea.sflag [#allocation3], %s286
        %s288 = sand.u32 %s49, 1
        %s289 = smul.addr %s288, 8
        %s290 = scalar_lea.vmem [#allocation2], %s289
        // Predicated region
        $region41: #{tpu_custom_call.1} parent=39 // pred_check
          %p291 = pneg %p62
        $region42: #{tpu_custom_call.1} parent=39 // pred_check_branch
          %293 = sbr.rel (%p291) target = $region44
        $region43: #{tpu_custom_call.1} parent=39 // pred_region
          %294 = dma.done %s287, 128
        $region44: #{tpu_custom_call.1} parent=39 // pred_fallthru
          _
        // Predicated region
        $region45: #{tpu_custom_call.1} parent=39 // pred_check
          %p295 = pneg %p83
        $region46: #{tpu_custom_call.1} parent=39 // pred_check_branch
          %297 = sbr.rel (%p295) target = $region48
        $region47: #{tpu_custom_call.1} parent=39 // pred_region
          %298 = dma.done [#allocation5], 64
        $region48: #{tpu_custom_call.1} parent=39 // pred_fallthru
          _
        // Predicated region
        $region49: #{tpu_custom_call.1} parent=39 // pred_check
          %p299 = pneg %p104
        $region50: #{tpu_custom_call.1} parent=39 // pred_check_branch
          %301 = sbr.rel (%p299) target = $region52
        $region51: #{tpu_custom_call.1} parent=39 // pred_region
          %302 = dma.done [#allocation8], 32
        $region52: #{tpu_custom_call.1} parent=39 // pred_fallthru
          _
        %s303 = sand.u32 %s147, 1
        %s304 = scalar_lea.sflag [#allocation10], %s303
        %s305 = sand.u32 %s147, 1
        %s306 = smul.addr %s305, 8
        %s307 = scalar_lea.vmem [#allocation9], %s306
        // Predicated region
        $region53: #{tpu_custom_call.1} parent=39 // pred_check
          %p308 = pneg %p160
        $region54: #{tpu_custom_call.1} parent=39 // pred_check_branch
          %310 = sbr.rel (%p308) target = $region56
        $region55: #{tpu_custom_call.1} parent=39 // pred_region
          %311 = dma.done %s304, 128
        $region56: #{tpu_custom_call.1} parent=39 // pred_fallthru
          _
        %312 = sfence
        %s313 = sand.u32 %s49, 1
        %s314 = scalar_lea.sflag [#allocation3], %s313
        %s315 = sand.u32 %s49, 1
        %s316 = smul.addr %s315, 8
        %s317 = scalar_lea.vmem [#allocation2], %s316
        %p318 = pneg %p62
        %p319 = pneg %p59
        %p320 = pneg %p83
        %p321 = pneg %p80
        %p322 = pneg %p104
        %p323 = pneg %p101
        %s324 = smul.u32 2, %s32
        %p325 = scmp.lt.s32.totalorder %s31, 1
        %s326 = scalar_select %p325, %s31, 1
        %p327 = scmp.lt.s32.totalorder %s324, 1
        %s328 = scalar_select %p327, %s324, 1
        %s329 = smul.addr %s326, 2
        %s330 = sadd.s32 %s328, %s329
        %s331 = scalar_lea.vmem %s3, %s330
        %p332 = pneg %p132
        %p333 = pneg %p129
        %s334 = sand.u32 %s147, 1
        %s335 = scalar_lea.sflag [#allocation10], %s334
        %s336 = sand.u32 %s147, 1
        %s337 = smul.addr %s336, 8
        %s338 = scalar_lea.vmem [#allocation9], %s337
        %p339 = pneg %p160
        %p340 = pneg %p157
        %p341 = pneg %p188
        %p342 = pneg %p185
        %s343 = sand.u32 %s175, 1
        %s344 = scalar_lea.sflag [#allocation4], %s343
        %s345 = sand.u32 %s175, 1
        %s346 = smul.addr %s345, 8
        %s347 = scalar_lea.vmem [#allocation11], %s346
        %s348 = smul.u32 2, %s32
        %s349 = smul.u32 2, %s32
        %p350 = scmp.lt.s32.totalorder %s31, 1
        %s351 = scalar_select %p350, %s31, 1
        %p352 = scmp.lt.s32.totalorder %s349, 1
        %s353 = scalar_select %p352, %s349, 1
        %s354 = smul.addr %s351, 2
        %s355 = sadd.s32 %s353, %s354
        %s356 = scalar_lea.vmem %s3, %s355
        %s357 = smul.u32 2, %s32
        %s358 = smul.u32 2, %s32
        %s359 = smul.u32 2, %s32
        %v360 = vld [vmem:[%s290] sm:$0xff]
        %v361 = vld [vmem:[%s356] sm:$0x3]
        %v362 = vld [vmem:[%s307] sm:$0xff]
        %s363 = sld [smem:[#allocation6]]
        %v364 = vstv %s363
        %v365 = vmul.f32 %v360, %v364
        %s366 = sld [smem:[#allocation6 + $0x1]]
        %v367 = vstv %s366
        %v368 = vmul.f32 %v360, %v367
        %v370 = vrot.slane %v368, 5
        %v371 = vrot.slane %v370, 4
        %v373 = vadd.f32 %v365, %v371
        %s374 = sld [smem:[#allocation6 + $0x2]]
        %v375 = vstv %s374
        %v376 = vmul.f32 %v360, %v375
        %v378 = vrot.slane %v376, 6
        %v379 = vrot.slane %v378, 4
        %v381 = vadd.f32 %v373, %v379
        %s382 = sld [smem:[#allocation6 + $0x3]]
        %v383 = vstv %s382
        %v384 = vmul.f32 %v360, %v383
        %v386 = vrot.slane %v384, 7
        %v387 = vrot.slane %v386, 4
        %v389 = vadd.f32 %v381, %v387
        %s390 = smul.u32 %s31, 128
        %s391 = sld [smem:[#allocation7 + %s390]]
        %v392 = vstv %s391
        %v393 = vadd.f32 %v389, %v392
        %v394 = vsub.f32 1.0, %v361
        %v397 = vunpack.c.l.s4 286326784
        %v398 = vunpack.c.0.s8 %v397
        %v399 = vlaneseq
        %v400 = vshrl.u32 %v399, 7
        %v401 = vsub.s32 %v398, %v400
        %v402 = vrot.slane %v394, %v401
        %v404 = vmul.f32 %v362, %v402
        %v407 = vunpack.c.l.s4 1966171168
        %v408 = vunpack.c.0.s8 %v407
        %v409 = vlaneseq
        %v410 = vshrl.u32 %v409, 7
        %v411 = vsub.s32 %v408, %v410
        %v412 = vrot.slane %v393, %v411
        %v414 = vunpack.c.l.s4 1966171168
        %v415 = vunpack.c.0.s8 %v414
        %v416 = vlaneseq
        %v417 = vshrl.u32 %v416, 7
        %v418 = vsub.s32 %v415, %v417
        %v419 = vrot.slane %v412, %v418
        %v421 = vmul.f32 %v361, %v419
        %v424 = vunpack.c.l.s4 286326784
        %v425 = vunpack.c.0.s8 %v424
        %v426 = vlaneseq
        %v427 = vshrl.u32 %v426, 7
        %v428 = vsub.s32 %v425, %v427
        %v429 = vrot.slane %v421, %v428
        %v431 = vadd.f32 %v404, %v429
        %s432 = sld [smem:[#allocation6 + $0x80]]
        %v433 = vstv %s432
        %v434 = vmul.f32 %v360, %v433
        %s435 = sld [smem:[#allocation6 + $0x81]]
        %v436 = vstv %s435
        %v437 = vmul.f32 %v360, %v436
        %v439 = vrot.slane %v437, 5
        %v440 = vrot.slane %v439, 4
        %v442 = vadd.f32 %v434, %v440
        %s443 = sld [smem:[#allocation6 + $0x82]]
        %v444 = vstv %s443
        %v445 = vmul.f32 %v360, %v444
        %v447 = vrot.slane %v445, 6
        %v448 = vrot.slane %v447, 4
        %v450 = vadd.f32 %v442, %v448
        %s451 = sld [smem:[#allocation6 + $0x83]]
        %v452 = vstv %s451
        %v453 = vmul.f32 %v360, %v452
        %v455 = vrot.slane %v453, 7
        %v456 = vrot.slane %v455, 4
        %v458 = vadd.f32 %v450, %v456
        %s459 = sadd.s32 %s390, 1
        %s460 = sld [smem:[#allocation7 + %s459]]
        %v461 = vstv %s460
        %v462 = vadd.f32 %v458, %v461
        %v465 = vunpack.c.l.s4 1966171168
        %v466 = vunpack.c.0.s8 %v465
        %v467 = vlaneseq
        %v468 = vshrl.u32 %v467, 7
        %v469 = vsub.s32 %v466, %v468
        %v470 = vrot.slane %v462, %v469
        %v472 = vunpack.c.l.s4 1966171168
        %v473 = vunpack.c.0.s8 %v472
        %v474 = vlaneseq
        %v475 = vshrl.u32 %v474, 7
        %v476 = vsub.s32 %v473, %v475
        %v477 = vrot.slane %v470, %v476
        %v479 = vmul.f32 %v361, %v477
        %v482 = vunpack.c.l.s4 286326784
        %v483 = vunpack.c.0.s8 %v482
        %v484 = vlaneseq
        %v485 = vshrl.u32 %v484, 7
        %v486 = vsub.s32 %v483, %v485
        %v487 = vrot.slane %v479, %v486
        %v489 = vadd.f32 %v404, %v487
        %s490 = sld [smem:[#allocation6 + $0x100]]
        %v491 = vstv %s490
        %v492 = vmul.f32 %v360, %v491
        %s493 = sld [smem:[#allocation6 + $0x101]]
        %v494 = vstv %s493
        %v495 = vmul.f32 %v360, %v494
        %v497 = vrot.slane %v495, 5
        %v498 = vrot.slane %v497, 4
        %v500 = vadd.f32 %v492, %v498
        %s501 = sld [smem:[#allocation6 + $0x102]]
        %v502 = vstv %s501
        %v503 = vmul.f32 %v360, %v502
        %v505 = vrot.slane %v503, 6
        %v506 = vrot.slane %v505, 4
        %v508 = vadd.f32 %v500, %v506
        %s509 = sld [smem:[#allocation6 + $0x103]]
        %v510 = vstv %s509
        %v511 = vmul.f32 %v360, %v510
        %v513 = vrot.slane %v511, 7
        %v514 = vrot.slane %v513, 4
        %v516 = vadd.f32 %v508, %v514
        %s517 = sadd.s32 %s390, 2
        %s518 = sld [smem:[#allocation7 + %s517]]
        %v519 = vstv %s518
        %v520 = vadd.f32 %v516, %v519
        %v523 = vunpack.c.l.s4 1966171168
        %v524 = vunpack.c.0.s8 %v523
        %v525 = vlaneseq
        %v526 = vshrl.u32 %v525, 7
        %v527 = vsub.s32 %v524, %v526
        %v528 = vrot.slane %v520, %v527
        %v530 = vunpack.c.l.s4 1966171168
        %v531 = vunpack.c.0.s8 %v530
        %v532 = vlaneseq
        %v533 = vshrl.u32 %v532, 7
        %v534 = vsub.s32 %v531, %v533
        %v535 = vrot.slane %v528, %v534
        %v537 = vmul.f32 %v361, %v535
        %v540 = vunpack.c.l.s4 286326784
        %v541 = vunpack.c.0.s8 %v540
        %v542 = vlaneseq
        %v543 = vshrl.u32 %v542, 7
        %v544 = vsub.s32 %v541, %v543
        %v545 = vrot.slane %v537, %v544
        %v547 = vadd.f32 %v404, %v545
        %s548 = sld [smem:[#allocation6 + $0x180]]
        %v549 = vstv %s548
        %v550 = vmul.f32 %v360, %v549
        %s551 = sld [smem:[#allocation6 + $0x181]]
        %v552 = vstv %s551
        %v553 = vmul.f32 %v360, %v552
        %v555 = vrot.slane %v553, 5
        %v556 = vrot.slane %v555, 4
        %v558 = vadd.f32 %v550, %v556
        %s559 = sld [smem:[#allocation6 + $0x182]]
        %v560 = vstv %s559
        %v561 = vmul.f32 %v360, %v560
        %v563 = vrot.slane %v561, 6
        %v564 = vrot.slane %v563, 4
        %v566 = vadd.f32 %v558, %v564
        %s567 = sld [smem:[#allocation6 + $0x183]]
        %v568 = vstv %s567
        %v569 = vmul.f32 %v360, %v568
        %v571 = vrot.slane %v569, 7
        %v572 = vrot.slane %v571, 4
        %v574 = vadd.f32 %v566, %v572
        %s575 = sadd.s32 %s390, 3
        %s576 = sld [smem:[#allocation7 + %s575]]
        %v577 = vstv %s576
        %v578 = vadd.f32 %v574, %v577
        %v581 = vunpack.c.l.s4 1966171168
        %v582 = vunpack.c.0.s8 %v581
        %v583 = vlaneseq
        %v584 = vshrl.u32 %v583, 7
        %v585 = vsub.s32 %v582, %v584
        %v586 = vrot.slane %v578, %v585
        %v588 = vunpack.c.l.s4 1966171168
        %v589 = vunpack.c.0.s8 %v588
        %v590 = vlaneseq
        %v591 = vshrl.u32 %v590, 7
        %v592 = vsub.s32 %v589, %v591
        %v593 = vrot.slane %v586, %v592
        %v595 = vmul.f32 %v361, %v593
        %v598 = vunpack.c.l.s4 286326784
        %v599 = vunpack.c.0.s8 %v598
        %v600 = vlaneseq
        %v601 = vshrl.u32 %v600, 7
        %v602 = vsub.s32 %v599, %v601
        %v603 = vrot.slane %v595, %v602
        %v605 = vadd.f32 %v404, %v603
        %v607 = vlaneseq
        %v608 = vshrl.u32 %v607, 7
        %v609 = vsub.s32 0, %v608
        %v610 = vrot.slane %v431, %v609
        %v611 = vlaneseq
        %v612 = vshrl.u32 %v611, 7
        %v613 = vsub.s32 4, %v612
        %v614 = vrot.slane %v431, %v613
        %v618 = vlaneseq
        %v619 = vshrl.u32 %v618, 7
        %v620 = vsub.s32 1, %v619
        %v621 = vrot.slane %v489, %v620
        %v622 = vlaneseq
        %v623 = vshrl.u32 %v622, 7
        %v624 = vsub.s32 5, %v623
        %v625 = vrot.slane %v489, %v624
        %v629 = vlaneseq
        %v630 = vshrl.u32 %v629, 7
        %v631 = vsub.s32 2, %v630
        %v632 = vrot.slane %v547, %v631
        %v633 = vlaneseq
        %v634 = vshrl.u32 %v633, 7
        %v635 = vsub.s32 6, %v634
        %v636 = vrot.slane %v547, %v635
        %v640 = vlaneseq
        %v641 = vshrl.u32 %v640, 7
        %v642 = vsub.s32 3, %v641
        %v643 = vrot.slane %v605, %v642
        %v644 = vlaneseq
        %v645 = vshrl.u32 %v644, 7
        %v646 = vsub.s32 7, %v645
        %v647 = vrot.slane %v605, %v646
        %vm650 = vcmask 1040384
        %v651 = vsel %vm650, %v610, %v621
        %v652 = vsel %vm650, %v614, %v625
        %vm653 = vcmask 1041408
        %v654 = vsel %vm653, %v651, %v632
        %v655 = vsel %vm653, %v652, %v636
        %vm656 = vcmask 1042432
        %v657 = vsel %vm656, %v654, %v643
        %v658 = vsel %vm656, %v655, %v647
        %v661 = vcombine.low %v657, %v658
        %663 = vst [vmem:[%s347] sm:$0xff] %v661
        %s664 = sand.u32 %s175, 1
        %s665 = scalar_lea.sflag [#allocation4], %s664
        %s666 = sand.u32 %s175, 1
        %s667 = smul.addr %s666, 8
        %s668 = scalar_lea.vmem [#allocation11], %s667
        // Predicated region
        $region57: #{tpu_custom_call.1} parent=39 // pred_check
          %p669 = pneg %p185
        $region58: #{tpu_custom_call.1} parent=39 // pred_check_branch
          %671 = sbr.rel (%p669) target = $region60
        $region59: #{tpu_custom_call.1} parent=39 // pred_region
          %s672 = smul.u32 2, %s32
          %s674 = ssub.s32 128, 128
          %675 = vsyncadd %s665, %s674
          %s676 = smul.addr %s31, 2
          %s677 = sadd.s32 %s672, %s676
          %s678 = smul.addr %s677, 64
          %s679 = scalar_lea.hbm %s5, %s678
          %s681 = sshll.u32 %s668, 4
          %s682 = int_to_ptr.vmem [resolvable:$true] %s681
          %684 = dma.vmem_to_hbm [thread:$0]  %s682, 128, %s679, %s665
        $region60: #{tpu_custom_call.1} parent=39 // pred_fallthru
          _
      $region40: #{tpu_custom_call.1} parent=5 // pred_fallthru
        _
      %p685 = scmp.le.s32.totalorder 2, %s22
      // Predicated region
      $region61: #{tpu_custom_call.1} parent=5 // pred_check
        %p686 = pneg %p685
      $region62: #{tpu_custom_call.1} parent=5 // pred_check_branch
        %688 = sbr.rel (%p686) target = $region64
      $region63: #{tpu_custom_call.1} parent=5 // pred_region
        %s689 = ssub.s32 %s22, 2
        // Predicated region
        $region65: #{tpu_custom_call.1} parent=63 // pred_check
          %p690 = pneg %p191
        $region66: #{tpu_custom_call.1} parent=63 // pred_check_branch
          %692 = sbr.rel (%p690) target = $region68
        $region67: #{tpu_custom_call.1} parent=63 // pred_region
          %s693 = sand.u32 %s176, 1
          %s694 = scalar_lea.sflag [#allocation4], %s693
          %s695 = sand.u32 %s176, 1
          %s696 = smul.addr %s695, 8
          %s697 = scalar_lea.vmem [#allocation11], %s696
          %698 = dma.done %s694, 128
        $region68: #{tpu_custom_call.1} parent=63 // pred_fallthru
          _
      $region64: #{tpu_custom_call.1} parent=5 // pred_fallthru
        _
    $region6: #{tpu_custom_call.1} parent=1 // loop_footer
      %s26 = sadd.s32 1, %s22
    $region7: #{tpu_custom_call.1} parent=1 // loop_footer_branch
      %21 = sbr.rel target = $region3
    $region8: #{tpu_custom_call.1} parent=1 // loop_exit
      _
    %699 = vsyncpa [#allocation3], 1
    %s700 = scalar_lea.sflag [#allocation3], 1
    %701 = vsyncpa %s700, 1
    %702 = vsyncpa [#allocation10], 1
    %s703 = scalar_lea.sflag [#allocation10], 1
    %704 = vsyncpa %s703, 1
    %705 = vsyncpa [#allocation4], 1
    %s706 = scalar_lea.sflag [#allocation4], 1
    %707 = vsyncpa %s706, 1
    %708 = vsyncpa [#allocation5], 1
    %s709 = scalar_lea.sflag [#allocation5], 1
    %710 = vsyncpa %s709, 1
    %711 = vsyncpa [#allocation8], 1

</llo_original>
